<compile_context>
chip_gen: v7x
topology: tpu7x:2x2x1
jax: 0.10.0
libtpu: 0.0.40
codegen_flags: <defaults>
</compile_context>

<pallas_src>
import functools

import jax
import jax.numpy as jnp
from jax.experimental import pallas as pl
from jax.experimental.pallas import tpu as pltpu


_VMEM_LIMIT = 48 << 20      # safe on v5e/v6e (128 MiB phys) and v7x (64 MiB phys)
_FUSED_BUDGET = 24 << 20    # max estimated per-step VMEM working set for fused path


def _round_up(n, m):
    return ((n + m - 1) // m) * m


def _pick_bt(B, cap=8):
    # Batch several images per grid step (amortize per-step overhead) but keep
    # >=2 steps along the parallel batch axis so both v7x TensorCores are used.
    divs = [d for d in range(1, min(B, cap) + 1) if B % d == 0 and B // d >= 2]
    return max(divs) if divs else 1


def _conv_du(y, w1, b1r, w2, b2r):
    """y: (Bt, C) f32 -> (Bt, C) f32 channel attention. Tiny; VPU/MXU cost is noise."""
    h = jnp.einsum("bc,rc->br", y, w1, preferred_element_type=jnp.float32) + b1r
    h = jnp.maximum(h, 0.0)
    z = jnp.einsum("br,cr->bc", h, w2, preferred_element_type=jnp.float32) + b2r
    return jax.nn.sigmoid(z)


# --------------------------------------------------------------------------
# Fused path: one kernel, whole (Bt, C, HW) block, single HBM read + write.
# --------------------------------------------------------------------------
def _cca_fused_kernel(x_ref, w1_ref, b1_ref, w2_ref, b2_ref, o_ref, *, inv_hw):
    xf = x_ref[...].astype(jnp.float32)                    # (Bt, C, HW)
    # single-pass statistics (one sweep over x)
    s1 = jnp.sum(xf, axis=-1)                              # (Bt, C)
    s2 = jnp.sum(xf * xf, axis=-1)                         # (Bt, C)
    mean = s1 * inv_hw
    var = jnp.maximum(s2 * inv_hw - mean * mean, 0.0)      # clamp: cancellation
    y = jnp.sqrt(var) + mean                               # contrast + avg_pool
    z = _conv_du(y, w1_ref[...], b1_ref[...], w2_ref[...], b2_ref[...])
    o_ref[...] = (xf * z[:, :, None]).astype(o_ref.dtype)


def _cca_fused(x3, w1, b1r, w2, b2r, bt):
    B, C, HW = x3.shape
    Cr = w1.shape[0]
    itemsize = x3.dtype.itemsize
    kernel = functools.partial(_cca_fused_kernel, inv_hw=1.0 / HW)
    cost = pl.CostEstimate(
        flops=int(6 * B * C * HW),
        transcendentals=int(2 * B * C),
        bytes_accessed=int(2 * B * C * HW * itemsize),
    )
    return pl.pallas_call(
        kernel,
        out_shape=jax.ShapeDtypeStruct((B, C, HW), x3.dtype),
        grid_spec=pltpu.PrefetchScalarGridSpec(
            num_scalar_prefetch=0,
            grid=(B // bt,),
            in_specs=[
                pl.BlockSpec((bt, C, HW), lambda b: (b, 0, 0)),
                pl.BlockSpec((Cr, C), lambda b: (0, 0)),
                pl.BlockSpec((1, Cr), lambda b: (0, 0)),
                pl.BlockSpec((C, Cr), lambda b: (0, 0)),
                pl.BlockSpec((1, C), lambda b: (0, 0)),
            ],
            out_specs=pl.BlockSpec((bt, C, HW), lambda b: (b, 0, 0)),
        ),
        compiler_params=pltpu.CompilerParams(
            dimension_semantics=("parallel",),
            vmem_limit_bytes=_VMEM_LIMIT,
        ),
        cost_estimate=cost,
    )(x3, w1, b1r, w2, b2r)


# --------------------------------------------------------------------------
# Tiled path: phase 1 (stats + conv_du -> z), phase 2 (scale), HW tiled.
# --------------------------------------------------------------------------
def _cca_stats_kernel(x_ref, w1_ref, b1_ref, w2_ref, b2_ref, z_ref,
                      s1_ref, s2_ref, *, inv_hw):
    t = pl.program_id(1)

    @pl.when(t == 0)
    def _():
        s1_ref[...] = jnp.zeros_like(s1_ref)
        s2_ref[...] = jnp.zeros_like(s2_ref)

    xf = x_ref[...].astype(jnp.float32)                    # (Bt, C, HWt)
    s1_ref[...] += jnp.sum(xf, axis=-1)
    s2_ref[...] += jnp.sum(xf * xf, axis=-1)

    @pl.when(t == pl.num_programs(1) - 1)
    def _():
        mean = s1_ref[...] * inv_hw
        var = jnp.maximum(s2_ref[...] * inv_hw - mean * mean, 0.0)
        y = jnp.sqrt(var) + mean
        z = _conv_du(y, w1_ref[...], b1_ref[...], w2_ref[...], b2_ref[...])
        z_ref[...] = z.astype(z_ref.dtype)


def _cca_scale_kernel(z_ref, x_ref, o_ref):
    z = z_ref[...].astype(jnp.float32)[:, :, None]         # (Bt, C, 1)
    o_ref[...] = (x_ref[...].astype(jnp.float32) * z).astype(o_ref.dtype)


def _cca_tiled(x3, w1, b1r, w2, b2r, bt, hw_tile_cap):
    B, C, HW = x3.shape
    Cr = w1.shape[0]
    itemsize = x3.dtype.itemsize

    # Lane-dense spatial tile: multiple of 128 -> unmasked vst on the output.
    cands = [d for d in range(128, min(hw_tile_cap, HW) + 1, 128) if HW % d == 0]
    if cands:
        hwt = max(cands)
        hw_pad = HW
    else:
        hwt = _round_up(min(hw_tile_cap, _round_up(HW, 128)), 128)
        hw_pad = _round_up(HW, hwt)

    if hw_pad != HW:
        # Zero padding leaves sum / sum-of-squares untouched (we divide by the
        # true HW) and the padded tail of the output is sliced off afterwards.
        x3p = jnp.pad(x3, ((0, 0), (0, 0), (0, hw_pad - HW)))
    else:
        x3p = x3

    n_b = B // bt
    n_t = hw_pad // hwt

    # ---- phase 1: per-channel statistics + conv_du -> z (B, C) f32 ----
    stats_kernel = functools.partial(_cca_stats_kernel, inv_hw=1.0 / HW)
    z = pl.pallas_call(
        stats_kernel,
        out_shape=jax.ShapeDtypeStruct((B, C), jnp.float32),
        grid_spec=pltpu.PrefetchScalarGridSpec(
            num_scalar_prefetch=0,
            grid=(n_b, n_t),
            in_specs=[
                pl.BlockSpec((bt, C, hwt), lambda b, t: (b, 0, t)),
                pl.BlockSpec((Cr, C), lambda b, t: (0, 0)),
                pl.BlockSpec((1, Cr), lambda b, t: (0, 0)),
                pl.BlockSpec((C, Cr), lambda b, t: (0, 0)),
                pl.BlockSpec((1, C), lambda b, t: (0, 0)),
            ],
            out_specs=pl.BlockSpec((bt, C), lambda b, t: (b, 0)),
            scratch_shapes=[
                pltpu.VMEM((bt, C), jnp.float32),
                pltpu.VMEM((bt, C), jnp.float32),
            ],
        ),
        compiler_params=pltpu.CompilerParams(
            dimension_semantics=("parallel", "arbitrary"),
            vmem_limit_bytes=_VMEM_LIMIT,
        ),
        cost_estimate=pl.CostEstimate(
            flops=int(3 * B * C * hw_pad),
            transcendentals=int(2 * B * C),
            bytes_accessed=int(B * C * hw_pad * itemsize),
        ),
    )(x3p, w1, b1r, w2, b2r)

    # ---- phase 2: out = x * z (broadcast over spatial lanes) ----
    # Note: a deeper input pipeline (pipeline_mode=pl.Buffered(3)) could hide a
    # bit more DMA latency here; left at the default depth for portability.
    out = pl.pallas_call(
        _cca_scale_kernel,
        out_shape=jax.ShapeDtypeStruct((B, C, hw_pad), x3.dtype),
        grid_spec=pltpu.PrefetchScalarGridSpec(
            num_scalar_prefetch=0,
            grid=(n_b, n_t),
            in_specs=[
                pl.BlockSpec((bt, C), lambda b, t: (b, 0)),
                pl.BlockSpec((bt, C, hwt), lambda b, t: (b, 0, t)),
            ],
            out_specs=pl.BlockSpec((bt, C, hwt), lambda b, t: (b, 0, t)),
        ),
        compiler_params=pltpu.CompilerParams(
            dimension_semantics=("parallel", "parallel"),
            vmem_limit_bytes=_VMEM_LIMIT,
        ),
        cost_estimate=pl.CostEstimate(
            flops=int(B * C * hw_pad),
            transcendentals=0,
            bytes_accessed=int(2 * B * C * hw_pad * itemsize),
        ),
    )(z, x3p)
    return out


# --------------------------------------------------------------------------
# Public wrapper
# --------------------------------------------------------------------------
def cca_layer(x_nchw, w1, b1, w2, b2, *, mode="auto", hw_tile_cap=2048,
              block_batch=None):
    """CCALayer forward.  x:(B,C,H,W); w1:(Cr,C); b1:(Cr,)|(Cr,1); w2:(C,Cr); b2:(C,)|(C,1)."""
    B, C, H, W = x_nchw.shape
    HW = H * W
    Cr = w1.shape[0]
    x3 = x_nchw.reshape(B, C, HW)

    # biases as (1, Cr) / (1, C) row vectors -> direct broadcast in-kernel
    w1f = jnp.asarray(w1, jnp.float32)
    w2f = jnp.asarray(w2, jnp.float32)
    b1r = jnp.asarray(b1, jnp.float32).reshape(1, Cr)
    b2r = jnp.asarray(b2, jnp.float32).reshape(1, C)

    bt = block_batch if block_batch is not None else _pick_bt(B)
    assert B % bt == 0, "block_batch must divide the batch size"

    if mode == "auto":
        # per fused step: double-buffered input + output blocks + f32 temporaries
        per_step_bytes = bt * C * HW * (4 * x3.dtype.itemsize + 8)
        mode = "fused" if per_step_bytes <= _FUSED_BUDGET else "tiled"

    if mode == "fused":
        out3 = _cca_fused(x3, w1f, b1r, w2f, b2r, bt)
    else:
        out3 = _cca_tiled(x3, w1f, b1r, w2f, b2r, bt, hw_tile_cap)

    return out3[:, :, :HW].reshape(B, C, H, W)


# --------------------------------------------------------------------------
# Pure-JAX reference (mirrors the PyTorch module)
# --------------------------------------------------------------------------
def cca_reference(x, w1, b1, w2, b2):
    xf = x.astype(jnp.float32)
    mean = xf.mean(axis=(2, 3), keepdims=True)
    var = ((xf - mean) ** 2).mean(axis=(2, 3), keepdims=True)
    y = jnp.sqrt(var) + mean                                        # (B,C,1,1)
    h = jnp.einsum("oc,bcxy->boxy", w1, y) + b1.reshape(1, -1, 1, 1)
    h = jnp.maximum(h, 0.0)
    z = jnp.einsum("oc,bcxy->boxy", w2, h) + b2.reshape(1, -1, 1, 1)
    z = jax.nn.sigmoid(z)
    return xf * z


if __name__ == "__main__":
    reduction = 16
    C = 32
    Cr = C // reduction  # 2

    key = jax.random.PRNGKey(0)
    k1, k2, k3, k4, kx1, kx2, kx3 = jax.random.split(key, 7)

    w1 = jax.random.normal(k1, (Cr, C), dtype=jnp.float32) * 0.1
    b1 = jax.random.normal(k2, (Cr, 1), dtype=jnp.float32) * 0.1
    w2 = jax.random.normal(k3, (C, Cr), dtype=jnp.float32) * 0.1
    b2 = jax.random.normal(k4, (C, 1), dtype=jnp.float32) * 0.1

    ok = True

    # 1) small image -> fused whole-image path (auto)
    x_small = jax.random.normal(kx1, (2, C, 16, 16), dtype=jnp.float32)
    out = jax.block_until_ready(cca_layer(x_small, w1, b1, w2, b2))
    ref = jax.block_until_ready(cca_reference(x_small, w1, b1, w2, b2))
    ok &= out.shape == x_small.shape
    ok &= bool(jnp.allclose(out, ref, atol=1e-4, rtol=1e-4))

    # 2) forced tiled path with spatial padding (HW=1600 -> tiles of 512, padded)
    x_pad = jax.random.normal(kx2, (2, C, 40, 40), dtype=jnp.float32)
    out = jax.block_until_ready(
        cca_layer(x_pad, w1, b1, w2, b2, mode="tiled", hw_tile_cap=512))
    ref = jax.block_until_ready(cca_reference(x_pad, w1, b1, w2, b2))
    ok &= out.shape == x_pad.shape
    ok &= bool(jnp.allclose(out, ref, atol=1e-4, rtol=1e-4))

    # 3) forced tiled path, exact multiple-of-128 tiling, batched Bt=2
    x_tile = jax.random.normal(kx3, (4, C, 32, 32), dtype=jnp.float32)
    out = jax.block_until_ready(
        cca_layer(x_tile, w1, b1, w2, b2, mode="tiled", hw_tile_cap=512))
    ref = jax.block_until_ready(cca_reference(x_tile, w1, b1, w2, b2))
    ok &= out.shape == x_tile.shape
    ok &= bool(jnp.allclose(out, ref, atol=1e-4, rtol=1e-4))

    # 4) bf16 streaming smoke test (stats in f32 inside the kernel)
    x_bf16 = x_small.astype(jnp.bfloat16)
    out_bf16 = jax.block_until_ready(cca_layer(x_bf16, w1, b1, w2, b2))
    ref_f32 = jax.block_until_ready(cca_reference(x_bf16, w1, b1, w2, b2))
    ok &= out_bf16.dtype == jnp.bfloat16
    ok &= bool(jnp.max(jnp.abs(out_bf16.astype(jnp.float32) - ref_f32)) < 6e-2)

    assert ok, "mismatch vs reference"
    print("KERNEL_OK")
</pallas_src>

<mosaic_0001>
module attributes {stable_mosaic.version = 11 : i64} {
  func.func @_cca_fused_kernel(%arg0: i32, %arg1: memref<1x32x256xf32, #tpu.memory_space<vmem>>, %arg2: memref<2x32xf32, #tpu.memory_space<vmem>>, %arg3: memref<1x2xf32, #tpu.memory_space<vmem>>, %arg4: memref<32x2xf32, #tpu.memory_space<vmem>>, %arg5: memref<1x32xf32, #tpu.memory_space<vmem>>, %arg6: memref<1x32x256xf32, #tpu.memory_space<vmem>>) attributes {dimension_semantics = [#tpu.dimension_semantics<parallel>], iteration_bounds = array<i64: 2>, scalar_prefetch = 0 : i64, scratch_operands = 0 : i64, tpu.core_type = #tpu.core_type<tc>, window_params = [{transform_indices = @transform_0, window_bounds = array<i64: 1, 32, 256>}, {pipeline_mode = #tpu.pipeline_mode<synchronous>, transform_indices = @transform_1, window_bounds = array<i64: 2, 32>}, {pipeline_mode = #tpu.pipeline_mode<synchronous>, transform_indices = @transform_2, window_bounds = array<i64: 1, 2>}, {pipeline_mode = #tpu.pipeline_mode<synchronous>, transform_indices = @transform_3, window_bounds = array<i64: 32, 2>}, {pipeline_mode = #tpu.pipeline_mode<synchronous>, transform_indices = @transform_4, window_bounds = array<i64: 1, 32>}, {transform_indices = @transform_5, window_bounds = array<i64: 1, 32, 256>}]} {
    %c0 = arith.constant 0 : index
    %c0_0 = arith.constant 0 : index
    %c0_1 = arith.constant 0 : index
    %0 = vector.load %arg1[%c0, %c0_0, %c0_1] : memref<1x32x256xf32, #tpu.memory_space<vmem>>, vector<1x32x256xf32>
    %cst = arith.constant dense<0.000000e+00> : vector<1x32xf32>
    %1 = vector.multi_reduction <add>, %0, %cst [2] : vector<1x32x256xf32> to vector<1x32xf32>
    %2 = arith.mulf %0, %0 : vector<1x32x256xf32>
    %cst_2 = arith.constant dense<0.000000e+00> : vector<1x32xf32>
    %3 = vector.multi_reduction <add>, %2, %cst_2 [2] : vector<1x32x256xf32> to vector<1x32xf32>
    %cst_3 = arith.constant 3.906250e-03 : f32
    %4 = vector.broadcast %cst_3 : f32 to vector<1x32xf32>
    %5 = arith.mulf %1, %4 : vector<1x32xf32>
    %cst_4 = arith.constant 3.906250e-03 : f32
    %6 = vector.broadcast %cst_4 : f32 to vector<1x32xf32>
    %7 = arith.mulf %3, %6 : vector<1x32xf32>
    %8 = arith.mulf %5, %5 : vector<1x32xf32>
    %9 = arith.subf %7, %8 : vector<1x32xf32>
    %cst_5 = arith.constant 0.000000e+00 : f32
    %10 = vector.broadcast %cst_5 : f32 to vector<1x32xf32>
    %11 = arith.maximumf %9, %10 : vector<1x32xf32>
    %12 = math.sqrt %11 : vector<1x32xf32>
    %13 = arith.addf %12, %5 : vector<1x32xf32>
    %c0_6 = arith.constant 0 : index
    %c0_7 = arith.constant 0 : index
    %14 = vector.load %arg2[%c0_6, %c0_7] : memref<2x32xf32, #tpu.memory_space<vmem>>, vector<2x32xf32>
    %c0_8 = arith.constant 0 : index
    %c0_9 = arith.constant 0 : index
    %15 = vector.load %arg3[%c0_8, %c0_9] : memref<1x2xf32, #tpu.memory_space<vmem>>, vector<1x2xf32>
    %c0_10 = arith.constant 0 : index
    %c0_11 = arith.constant 0 : index
    %16 = vector.load %arg4[%c0_10, %c0_11] : memref<32x2xf32, #tpu.memory_space<vmem>>, vector<32x2xf32>
    %c0_12 = arith.constant 0 : index
    %c0_13 = arith.constant 0 : index
    %17 = vector.load %arg5[%c0_12, %c0_13] : memref<1x32xf32, #tpu.memory_space<vmem>>, vector<1x32xf32>
    "tpu.trace_start"() <{level = 10 : i32, message = "bc,rc->br"}> : () -> ()
    %cst_14 = arith.constant dense<0.000000e+00> : vector<1x2xf32>
    %18 = tpu.matmul %13, %14, %cst_14 {dimension_numbers = #tpu.dot_dimension_numbers<[1], [1], [0], [0], [0, 0, 1, 0], [], []>} : vector<1x32xf32>, vector<2x32xf32>, vector<1x2xf32> -> vector<1x2xf32>
    "tpu.trace_stop"() : () -> ()
    %19 = arith.addf %18, %15 : vector<1x2xf32>
    %cst_15 = arith.constant 0.000000e+00 : f32
    %20 = vector.broadcast %cst_15 : f32 to vector<1x2xf32>
    %21 = arith.maximumf %19, %20 : vector<1x2xf32>
    "tpu.trace_start"() <{level = 10 : i32, message = "br,cr->bc"}> : () -> ()
    %cst_16 = arith.constant dense<0.000000e+00> : vector<1x32xf32>
    %22 = tpu.matmul %21, %16, %cst_16 {dimension_numbers = #tpu.dot_dimension_numbers<[1], [1], [0], [0], [0, 0, 1, 0], [], []>} : vector<1x2xf32>, vector<32x2xf32>, vector<1x32xf32> -> vector<1x32xf32>
    "tpu.trace_stop"() : () -> ()
    %23 = arith.addf %22, %17 : vector<1x32xf32>
    %24 = arith.negf %23 : vector<1x32xf32>
    %25 = math.exp %24 : vector<1x32xf32>
    %cst_17 = arith.constant 1.000000e+00 : f32
    %26 = vector.broadcast %cst_17 : f32 to vector<1x32xf32>
    %27 = arith.addf %26, %25 : vector<1x32xf32>
    %28 = arith.divf %26, %27 : vector<1x32xf32>
    %29 = vector.shape_cast %28 : vector<1x32xf32> to vector<1x32x1xf32>
    %30 = vector.broadcast %29 : vector<1x32x1xf32> to vector<1x32x256xf32>
    %31 = arith.mulf %0, %30 : vector<1x32x256xf32>
    %c0_18 = arith.constant 0 : index
    %c0_19 = arith.constant 0 : index
    %c0_20 = arith.constant 0 : index
    %32 = vector.load %arg6[%c0_18, %c0_19, %c0_20] : memref<1x32x256xf32, #tpu.memory_space<vmem>>, vector<1x32x256xf32>
    tpu.vector_store %arg6[%c0_18, %c0_19, %c0_20], %31 {strides = array<i32>} : memref<1x32x256xf32, #tpu.memory_space<vmem>>, vector<1x32x256xf32>,
    return
  }
  func.func @transform_0(%arg0: i32) -> (i32, i32, i32) {
    %c0_i32 = arith.constant 0 : i32
    %c0_i32_0 = arith.constant 0 : i32
    %c0_i32_1 = arith.constant 0 : i32
    return %arg0, %c0_i32, %c0_i32_0 : i32, i32, i32
  }
  func.func @transform_1(%arg0: i32) -> (i32, i32) {
    %c0_i32 = arith.constant 0 : i32
    %c0_i32_0 = arith.constant 0 : i32
    %c0_i32_1 = arith.constant 0 : i32
    return %c0_i32, %c0_i32_0 : i32, i32
  }
  func.func @transform_2(%arg0: i32) -> (i32, i32) {
    %c0_i32 = arith.constant 0 : i32
    %c0_i32_0 = arith.constant 0 : i32
    %c0_i32_1 = arith.constant 0 : i32
    return %c0_i32, %c0_i32_0 : i32, i32
  }
  func.func @transform_3(%arg0: i32) -> (i32, i32) {
    %c0_i32 = arith.constant 0 : i32
    %c0_i32_0 = arith.constant 0 : i32
    %c0_i32_1 = arith.constant 0 : i32
    return %c0_i32, %c0_i32_0 : i32, i32
  }
  func.func @transform_4(%arg0: i32) -> (i32, i32) {
    %c0_i32 = arith.constant 0 : i32
    %c0_i32_0 = arith.constant 0 : i32
    %c0_i32_1 = arith.constant 0 : i32
    return %c0_i32, %c0_i32_0 : i32, i32
  }
  func.func @transform_5(%arg0: i32) -> (i32, i32, i32) {
    %c0_i32 = arith.constant 0 : i32
    %c0_i32_0 = arith.constant 0 : i32
    %c0_i32_1 = arith.constant 0 : i32
    return %arg0, %c0_i32, %c0_i32_0 : i32, i32, i32
  }
}

</mosaic_0001>

<llo_original>
// kernel: tpu_custom_call.1
$region0: #{tpu_custom_call.1}
  #allocation0 [shape = 'u32[]', space=smem, size = 0x4, offset = 0x4, fixed_abs, tag = 'smem constant byte address 0x4 - core index']
  #allocation1 [shape = 'u32[144,128]{1,0:T(1,128)}', space=vmem, size = 0x12000, scoped, tag = 'internal scratch']
  %s0 = inlined_call_operand.hbm [shape: f32[2,32,256], index: 0, kind: input, shape index: {}]
  %s1 = inlined_call_operand.vmem [shape: f32[2,32], index: 1, kind: input, shape index: {}]
  %s2 = inlined_call_operand.vmem [shape: f32[1,2], index: 2, kind: input, shape index: {}]
  %s3 = inlined_call_operand.vmem [shape: f32[32,2], index: 3, kind: input, shape index: {}]
  %s4 = inlined_call_operand.vmem [shape: f32[1,32], index: 4, kind: input, shape index: {}]
  %s5 = inlined_call_operand.hbm [shape: f32[2,32,256], index: 5, kind: output, shape index: {}]
  %s6 = sld [smem:[#allocation0]]
  $region57: #{tpu_custom_call.1} parent=0
    _
  %s8 = ssub.s32 1, %s6
  %s9 = scalar_select 0, %s8, %s6
  $region1: #{tpu_custom_call.1} parent=0
    #allocation2 [shape = 'u8[65536]{0}', space=vmem, size = 0x10000, scoped, tag = 'input window, operand 0']
    #allocation3 [shape = 's32[2]{0}', space=sflag, size = 0x8, scoped, tag = 'scoped memory for tpu_custom_call.1']
    #allocation4 [shape = 's32[2]{0}', space=sflag, size = 0x8, scoped, tag = 'scoped memory for tpu_custom_call.1']
    #allocation5 [shape = 'u8[65536]{0}', space=vmem, size = 0x10000, scoped, tag = 'output window, operand 0']
    %10 = vsyncpa [#allocation3], 0
    %s11 = scalar_lea.sflag [#allocation3], 1
    %12 = vsyncpa %s11, 0
    %13 = vsyncpa [#allocation4], 0
    %s14 = scalar_lea.sflag [#allocation4], 1
    %15 = vsyncpa %s14, 0
    loop: start=0, step=1, limit=4
    $region2: #{tpu_custom_call.1} parent=1 // loop_pre_header
      _
    $region3: #{tpu_custom_call.1} parent=1 // loop_header
      %s17 = sphi 0, %s21
      %p18 = scmp.ge.s32.totalorder %s17, 4
      %s27 = sphi 0, %s29
      %s30 = sphi 0, %s27
      %s31 = sphi 0, %s30
      %s47 = sphi 0, %s31
      %s51 = sphi 0, %s51
      %s53 = sphi 0, %s51
      %s54 = sphi 0, %s53
      %s68 = sphi 0, %s54
      %s72 = sphi 0, %s72
      %s74 = sphi 0, %s72
      %s75 = sphi 0, %s74
      %s89 = sphi 0, %s75
      %s93 = sphi 0, %s93
      %s95 = sphi 0, %s93
      %s96 = sphi 0, %s95
      %s110 = sphi 0, %s96
      %s114 = sphi 0, %s114
      %s116 = sphi 0, %s114
      %s117 = sphi 0, %s116
      %s131 = sphi 0, %s117
      %s137 = sphi 0, %s139
      %s140 = sphi 0, %s137
      %s141 = sphi 0, %s140
      %s157 = sphi 0, %s141
    $region4: #{tpu_custom_call.1} parent=1 // loop_header_branch
      %20 = sbr.rel (%p18) target = $region8
    $region5: #{tpu_custom_call.1} parent=1 // loop_body
      %s22 = ssub.s32 %s17, 1
      %s23 = ssub.s32 %s17, 2
      %s24 = sadd.s32 %s17, 1
      %s25 = ssub.s32 %s17, %s24
      %p26 = scmp.eq.s32.totalorder %s25, 0
      %s28 = sadd.s32 %s27, 1
      %s29 = scalar_select %p26, %s27, %s28
      %p32 = pneg %p26
      %p33 = scmp.eq.s32.totalorder %s17, 1
      %p34 = por %p32, %p33
      %p35 = scmp.ne.s32.totalorder %s27, %s30
      %p36 = scmp.eq.s32.totalorder %s17, 0
      %p37 = por %p35, %p36
      %p38 = scmp.ne.s32.totalorder %s27, %s30
      %p39 = scmp.eq.s32.totalorder %s22, 1
      %p40 = por %p38, %p39
      %p41 = scmp.ne.s32.totalorder %s30, %s31
      %p42 = scmp.eq.s32.totalorder %s22, 0
      %p43 = por %p41, %p42
      %p44 = scmp.ne.s32.totalorder %s30, %s31
      %p45 = scmp.eq.s32.totalorder %s23, 1
      %p46 = por %p44, %p45
      %p48 = scmp.ne.s32.totalorder %s31, %s47
      %p49 = scmp.eq.s32.totalorder %s23, 0
      %p50 = por %p48, %p49
      %s52 = sadd.s32 %s51, 1
      %p55 = scmp.eq.s32.totalorder %s17, 1
      %p56 = scmp.ne.s32.totalorder %s51, %s53
      %p57 = scmp.eq.s32.totalorder %s17, 0
      %p58 = por %p56, %p57
      %p59 = scmp.ne.s32.totalorder %s51, %s53
      %p60 = scmp.eq.s32.totalorder %s22, 1
      %p61 = por %p59, %p60
      %p62 = scmp.ne.s32.totalorder %s53, %s54
      %p63 = scmp.eq.s32.totalorder %s22, 0
      %p64 = por %p62, %p63
      %p65 = scmp.ne.s32.totalorder %s53, %s54
      %p66 = scmp.eq.s32.totalorder %s23, 1
      %p67 = por %p65, %p66
      %p69 = scmp.ne.s32.totalorder %s54, %s68
      %p70 = scmp.eq.s32.totalorder %s23, 0
      %p71 = por %p69, %p70
      %s73 = sadd.s32 %s72, 1
      %p76 = scmp.eq.s32.totalorder %s17, 1
      %p77 = scmp.ne.s32.totalorder %s72, %s74
      %p78 = scmp.eq.s32.totalorder %s17, 0
      %p79 = por %p77, %p78
      %p80 = scmp.ne.s32.totalorder %s72, %s74
      %p81 = scmp.eq.s32.totalorder %s22, 1
      %p82 = por %p80, %p81
      %p83 = scmp.ne.s32.totalorder %s74, %s75
      %p84 = scmp.eq.s32.totalorder %s22, 0
      %p85 = por %p83, %p84
      %p86 = scmp.ne.s32.totalorder %s74, %s75
      %p87 = scmp.eq.s32.totalorder %s23, 1
      %p88 = por %p86, %p87
      %p90 = scmp.ne.s32.totalorder %s75, %s89
      %p91 = scmp.eq.s32.totalorder %s23, 0
      %p92 = por %p90, %p91
      %s94 = sadd.s32 %s93, 1
      %p97 = scmp.eq.s32.totalorder %s17, 1
      %p98 = scmp.ne.s32.totalorder %s93, %s95
      %p99 = scmp.eq.s32.totalorder %s17, 0
      %p100 = por %p98, %p99
      %p101 = scmp.ne.s32.totalorder %s93, %s95
      %p102 = scmp.eq.s32.totalorder %s22, 1
      %p103 = por %p101, %p102
      %p104 = scmp.ne.s32.totalorder %s95, %s96
      %p105 = scmp.eq.s32.totalorder %s22, 0
      %p106 = por %p104, %p105
      %p107 = scmp.ne.s32.totalorder %s95, %s96
      %p108 = scmp.eq.s32.totalorder %s23, 1
      %p109 = por %p107, %p108
      %p111 = scmp.ne.s32.totalorder %s96, %s110
      %p112 = scmp.eq.s32.totalorder %s23, 0
      %p113 = por %p111, %p112
      %s115 = sadd.s32 %s114, 1
      %p118 = scmp.eq.s32.totalorder %s17, 1
      %p119 = scmp.ne.s32.totalorder %s114, %s116
      %p120 = scmp.eq.s32.totalorder %s17, 0
      %p121 = por %p119, %p120
      %p122 = scmp.ne.s32.totalorder %s114, %s116
      %p123 = scmp.eq.s32.totalorder %s22, 1
      %p124 = por %p122, %p123
      %p125 = scmp.ne.s32.totalorder %s116, %s117
      %p126 = scmp.eq.s32.totalorder %s22, 0
      %p127 = por %p125, %p126
      %p128 = scmp.ne.s32.totalorder %s116, %s117
      %p129 = scmp.eq.s32.totalorder %s23, 1
      %p130 = por %p128, %p129
      %p132 = scmp.ne.s32.totalorder %s117, %s131
      %p133 = scmp.eq.s32.totalorder %s23, 0
      %p134 = por %p132, %p133
      %s135 = ssub.s32 %s17, %s24
      %p136 = scmp.eq.s32.totalorder %s135, 0
      %s138 = sadd.s32 %s137, 1
      %s139 = scalar_select %p136, %s137, %s138
      %p142 = pneg %p136
      %p143 = scmp.eq.s32.totalorder %s17, 1
      %p144 = por %p142, %p143
      %p145 = scmp.ne.s32.totalorder %s137, %s140
      %p146 = scmp.eq.s32.totalorder %s17, 0
      %p147 = por %p145, %p146
      %p148 = scmp.ne.s32.totalorder %s137, %s140
      %p149 = scmp.eq.s32.totalorder %s22, 1
      %p150 = por %p148, %p149
      %p151 = scmp.ne.s32.totalorder %s140, %s141
      %p152 = scmp.eq.s32.totalorder %s22, 0
      %p153 = por %p151, %p152
      %p154 = scmp.ne.s32.totalorder %s140, %s141
      %p155 = scmp.eq.s32.totalorder %s23, 1
      %p156 = por %p154, %p155
      %p158 = scmp.ne.s32.totalorder %s141, %s157
      %p159 = scmp.eq.s32.totalorder %s23, 0
      %p160 = por %p158, %p159
      %p161 = scmp.le.s32.totalorder 1, %s17
      %p162 = scmp.lt.s32.totalorder %s17, 3
      %p163 = pnand %p161, %p162
      %p164 = pneg %p163
      // Predicated region
      $region9: #{tpu_custom_call.1} parent=5 // pred_check
        _
      $region10: #{tpu_custom_call.1} parent=5 // pred_check_branch
        %166 = sbr.rel (%p163) target = $region12
      $region11: #{tpu_custom_call.1} parent=5 // pred_region
        %s167 = ssub.s32 %s17, 1
        // Predicated region
        $region13: #{tpu_custom_call.1} parent=11 // pred_check
          %p168 = pneg %p64
        $region14: #{tpu_custom_call.1} parent=11 // pred_check_branch
          %170 = sbr.rel (%p168) target = $region16
        $region15: #{tpu_custom_call.1} parent=11 // pred_region
          _
        $region16: #{tpu_custom_call.1} parent=11 // pred_fallthru
          _
        // Predicated region
        $region17: #{tpu_custom_call.1} parent=11 // pred_check
          %p171 = pneg %p85
        $region18: #{tpu_custom_call.1} parent=11 // pred_check_branch
          %173 = sbr.rel (%p171) target = $region20
        $region19: #{tpu_custom_call.1} parent=11 // pred_region
          _
        $region20: #{tpu_custom_call.1} parent=11 // pred_fallthru
          _
        // Predicated region
        $region21: #{tpu_custom_call.1} parent=11 // pred_check
          %p174 = pneg %p106
        $region22: #{tpu_custom_call.1} parent=11 // pred_check_branch
          %176 = sbr.rel (%p174) target = $region24
        $region23: #{tpu_custom_call.1} parent=11 // pred_region
          _
        $region24: #{tpu_custom_call.1} parent=11 // pred_fallthru
          _
        // Predicated region
        $region25: #{tpu_custom_call.1} parent=11 // pred_check
          %p177 = pneg %p127
        $region26: #{tpu_custom_call.1} parent=11 // pred_check_branch
          %179 = sbr.rel (%p177) target = $region28
        $region27: #{tpu_custom_call.1} parent=11 // pred_region
          _
        $region28: #{tpu_custom_call.1} parent=11 // pred_fallthru
          _
      $region12: #{tpu_custom_call.1} parent=5 // pred_fallthru
        _
      %p180 = scmp.lt.s32.totalorder %s17, 2
      // Predicated region
      $region29: #{tpu_custom_call.1} parent=5 // pred_check
        %p181 = pneg %p180
      $region30: #{tpu_custom_call.1} parent=5 // pred_check_branch
        %183 = sbr.rel (%p181) target = $region32
      $region31: #{tpu_custom_call.1} parent=5 // pred_region
        // Predicated region
        $region33: #{tpu_custom_call.1} parent=31 // pred_check
          %p184 = pneg %p37
        $region34: #{tpu_custom_call.1} parent=31 // pred_check_branch
          %186 = sbr.rel (%p184) target = $region36
        $region35: #{tpu_custom_call.1} parent=31 // pred_region
          %s187 = sand.u32 %s27, 1
          %s188 = scalar_lea.sflag [#allocation3], %s187
          %s189 = sand.u32 %s27, 1
          %s190 = smul.addr %s189, 64
          %s191 = scalar_lea.vmem [#allocation2], %s190
          %s193 = ssub.s32 1024, 1024
          %194 = vsyncadd %s188, %s193
          %s195 = smul.addr %s17, 8
          %s196 = smul.addr %s195, 128
          %s197 = scalar_lea.hbm %s0, %s196
          %s198 = sshll.u32 %s191, 4
          %s199 = int_to_ptr.vmem [resolvable:$true] %s198
          %204 = dma.hbm_to_vmem [thread:$0]  %s197, 1024, %s199, %s188, 256, 256, 16
        $region36: #{tpu_custom_call.1} parent=31 // pred_fallthru
          _
      $region32: #{tpu_custom_call.1} parent=5 // pred_fallthru
        _
      %p205 = scmp.le.s32.totalorder 1, %s17
      %p206 = scmp.lt.s32.totalorder %s17, 3
      %p207 = pnand %p205, %p206
      %p208 = pneg %p207
      // Predicated region
      $region37: #{tpu_custom_call.1} parent=5 // pred_check
        _
      $region38: #{tpu_custom_call.1} parent=5 // pred_check_branch
        %210 = sbr.rel (%p207) target = $region40
      $region39: #{tpu_custom_call.1} parent=5 // pred_region
        %s211 = ssub.s32 %s17, 1
        %s212 = sand.u32 %s30, 1
        %s213 = scalar_lea.sflag [#allocation3], %s212
        %s214 = sand.u32 %s30, 1
        %s215 = smul.addr %s214, 64
        %s216 = scalar_lea.vmem [#allocation2], %s215
        // Predicated region
        $region41: #{tpu_custom_call.1} parent=39 // pred_check
          %p217 = pneg %p43
        $region42: #{tpu_custom_call.1} parent=39 // pred_check_branch
          %219 = sbr.rel (%p217) target = $region44
        $region43: #{tpu_custom_call.1} parent=39 // pred_region
          %220 = dma.done %s213, 1024
        $region44: #{tpu_custom_call.1} parent=39 // pred_fallthru
          _
        %s221 = sand.u32 %s30, 1
        %s222 = scalar_lea.sflag [#allocation3], %s221
        %s223 = sand.u32 %s30, 1
        %s224 = smul.addr %s223, 64
        %s225 = scalar_lea.vmem [#allocation2], %s224
        %p226 = pneg %p43
        %p227 = pneg %p40
        %p228 = pneg %p64
        %p229 = pneg %p61
        %p230 = pneg %p85
        %p231 = pneg %p82
        %p232 = pneg %p106
        %p233 = pneg %p103
        %p234 = pneg %p127
        %p235 = pneg %p124
        %p236 = pneg %p153
        %p237 = pneg %p150
        %s238 = sand.u32 %s140, 1
        %s239 = scalar_lea.sflag [#allocation4], %s238
        %s240 = sand.u32 %s140, 1
        %s241 = smul.addr %s240, 64
        %s242 = scalar_lea.vmem [#allocation5], %s241
        %v243 = vld [vmem:[%s216] sm:$0xff]
        %v244 = vld [vmem:[%s216 + $0x8] sm:$0xff]
        %v245 = vld [vmem:[%s216 + $0x10] sm:$0xff]
        %v246 = vld [vmem:[%s216 + $0x18] sm:$0xff]
        %v247 = vld [vmem:[%s216 + $0x20] sm:$0xff]
        %v248 = vld [vmem:[%s216 + $0x28] sm:$0xff]
        %v249 = vld [vmem:[%s216 + $0x30] sm:$0xff]
        %v250 = vld [vmem:[%s216 + $0x38] sm:$0xff]
        %v251 = vadd.f32 %v243, %v244
        %252 = vadd.xlane.f32.xlu0 %v251
        %v253 = vpop.xlane.xlu0 %252
        %v254 = vadd.f32 %v245, %v246
        %255 = vadd.xlane.f32.xlu0 %v254
        %v256 = vpop.xlane.xlu0 %255
        %v257 = vadd.f32 %v247, %v248
        %258 = vadd.xlane.f32.xlu0 %v257
        %v259 = vpop.xlane.xlu0 %258
        %v260 = vadd.f32 %v249, %v250
        %261 = vadd.xlane.f32.xlu0 %v260
        %v262 = vpop.xlane.xlu0 %261
        %v263 = vmul.f32 %v243, %v243
        %v264 = vmul.f32 %v244, %v244
        %v265 = vmul.f32 %v245, %v245
        %v266 = vmul.f32 %v246, %v246
        %v267 = vmul.f32 %v247, %v247
        %v268 = vmul.f32 %v248, %v248
        %v269 = vmul.f32 %v249, %v249
        %v270 = vmul.f32 %v250, %v250
        %v271 = vadd.f32 %v263, %v264
        %272 = vadd.xlane.f32.xlu0 %v271
        %v273 = vpop.xlane.xlu0 %272
        %v274 = vadd.f32 %v265, %v266
        %275 = vadd.xlane.f32.xlu0 %v274
        %v276 = vpop.xlane.xlu0 %275
        %v277 = vadd.f32 %v267, %v268
        %278 = vadd.xlane.f32.xlu0 %v277
        %v279 = vpop.xlane.xlu0 %278
        %v280 = vadd.f32 %v269, %v270
        %281 = vadd.xlane.f32.xlu0 %v280
        %v282 = vpop.xlane.xlu0 %281
        %v283 = vmul.f32 %v253, 0.00390625
        %v284 = vmul.f32 %v256, 0.00390625
        %v285 = vmul.f32 %v259, 0.00390625
        %v286 = vmul.f32 %v262, 0.00390625
        %v287 = vmul.f32 %v273, 0.00390625
        %v288 = vmul.f32 %v276, 0.00390625
        %v289 = vmul.f32 %v279, 0.00390625
        %v290 = vmul.f32 %v282, 0.00390625
        %v291 = vmul.f32 %v283, %v283
        %v292 = vmul.f32 %v284, %v284
        %v293 = vmul.f32 %v285, %v285
        %v294 = vmul.f32 %v286, %v286
        %v295 = vsub.f32 %v287, %v291
        %v296 = vsub.f32 %v288, %v292
        %v297 = vsub.f32 %v289, %v293
        %v298 = vsub.f32 %v290, %v294
        %v299 = vmax.f32 %v295, 0.0
        %v300 = vmax.f32 %v296, 0.0
        %v301 = vmax.f32 %v297, 0.0
        %v302 = vmax.f32 %v298, 0.0
        %v303 = vrsqrt.pop %v299
        %v304 = vmul.f32 %v299, %v303
        %vm305 = vcmp.eq.f32.partialorder %v299, inf
        %v306 = vsel %vm305, %v299, %v304
        %vm307 = vcmp.eq.f32.partialorder %v299, 0.0
        %v308 = vand.u32 %v299, 2147483648
        %v309 = vsel %vm307, %v308, %v306
        %v310 = vrsqrt.pop %v300
        %v311 = vmul.f32 %v300, %v310
        %vm312 = vcmp.eq.f32.partialorder %v300, inf
        %v313 = vsel %vm312, %v300, %v311
        %vm314 = vcmp.eq.f32.partialorder %v300, 0.0
        %v315 = vand.u32 %v300, 2147483648
        %v316 = vsel %vm314, %v315, %v313
        %v317 = vrsqrt.pop %v301
        %v318 = vmul.f32 %v301, %v317
        %vm319 = vcmp.eq.f32.partialorder %v301, inf
        %v320 = vsel %vm319, %v301, %v318
        %vm321 = vcmp.eq.f32.partialorder %v301, 0.0
        %v322 = vand.u32 %v301, 2147483648
        %v323 = vsel %vm321, %v322, %v320
        %v324 = vrsqrt.pop %v302
        %v325 = vmul.f32 %v302, %v324
        %vm326 = vcmp.eq.f32.partialorder %v302, inf
        %v327 = vsel %vm326, %v302, %v325
        %vm328 = vcmp.eq.f32.partialorder %v302, 0.0
        %v329 = vand.u32 %v302, 2147483648
        %v330 = vsel %vm328, %v329, %v327
        %v331 = vadd.f32 %v309, %v283
        %v332 = vadd.f32 %v316, %v284
        %v333 = vadd.f32 %v323, %v285
        %v334 = vadd.f32 %v330, %v286
        %v335 = vld [vmem:[%s1] sm:$0x3]
        %v336 = vld [vmem:[%s2] sm:$0x1]
        %v337 = vld [vmem:[%s3] sm:$0xff]
        %v338 = vld [vmem:[%s3 + $0x8] sm:$0xff]
        %v339 = vld [vmem:[%s3 + $0x10] sm:$0xff]
        %v340 = vld [vmem:[%s3 + $0x18] sm:$0xff]
        %v341 = vld [vmem:[%s4] sm:$0x1]
        %v346 = vlaneseq
        %v347 = vand.u32 %v346, 127
        %v348 = vlaneseq
        %v349 = vshrl.u32 %v348, 7
        %v350 = vsub.s32 %v347, %v349
        %v351 = vrot.slane %v331, %v350
        %v352 = vadd.s32 %v347, 4294967288
        %v353 = vlaneseq
        %v354 = vshrl.u32 %v353, 7
        %v355 = vsub.s32 %v352, %v354
        %v356 = vrot.slane %v332, %v355
        %vm357 = vcmask 130112
        %v358 = vsel %vm357, %v356, %v351
        %v359 = vadd.s32 %v347, 4294967280
        %v360 = vlaneseq
        %v361 = vshrl.u32 %v360, 7
        %v362 = vsub.s32 %v359, %v361
        %v363 = vrot.slane %v333, %v362
        %vm364 = vcmask 195712
        %v365 = vsel %vm364, %v363, %v358
        %v366 = vadd.s32 %v347, 4294967272
        %v367 = vlaneseq
        %v368 = vshrl.u32 %v367, 7
        %v369 = vsub.s32 %v366, %v368
        %v370 = vrot.slane %v334, %v369
        %vm371 = vcmask 261312
        %v372 = vsel %vm371, %v370, %v365
        %vm373 = vcmask 261120
        %v374 = vsel %vm373, %v372, 0
        %v377 = vsel %vm373, %v335, 0
        %379 = vmatprep.subr.mxu0 0.0
        %380 = vmatpush1.xpose.msra.mxu0 %v377
        %381 = vmatprep.subr.mxu0 0.0
        %382 = vmatpush1.xpose.msra.mxu0 0.0
        %383 = vmatprep.subr.mxu0 0.0
        %384 = vmatpush1.xpose.msra.mxu0 0.0
        %385 = vmatprep.subr.mxu0 0.0
        %386 = vmatpush1.xpose.msra.mxu0 0.0
        %387 = vmatprep.subr.mxu0 0.0
        %388 = vmatpush1.xpose.msra.mxu0 0.0
        %389 = vmatprep.subr.mxu0 0.0
        %390 = vmatpush1.xpose.msra.mxu0 0.0
        %391 = vmatprep.subr.mxu0 0.0
        %392 = vmatpush1.xpose.msra.mxu0 0.0
        %393 = vmatprep.subr.mxu0 0.0
        %394 = vmatpush1.xpose.msra.mxu0 0.0
        %395 = vmatprep.subr.mxu0 0.0
        %396 = vmatpush1.xpose.msra.mxu0 0.0
        %397 = vmatprep.subr.mxu0 0.0
        %398 = vmatpush1.xpose.msra.mxu0 0.0
        %399 = vmatprep.subr.mxu0 0.0
        %400 = vmatpush1.xpose.msra.mxu0 0.0
        %401 = vmatprep.subr.mxu0 0.0
        %402 = vmatpush1.xpose.msra.mxu0 0.0
        %403 = vmatprep.subr.mxu0 0.0
        %404 = vmatpush1.xpose.msra.mxu0 0.0
        %405 = vmatprep.subr.mxu0 0.0
        %406 = vmatpush1.xpose.msra.mxu0 0.0
        %407 = vmatprep.subr.mxu0 0.0
        %408 = vmatpush1.xpose.msra.mxu0 0.0
        %409 = vmatprep.subr.mxu0 0.0
        %410 = vmatpush1.xpose.msra.mxu0 0.0
        %411 = vmatprep.subr.mxu0 0.0
        %412 = vmatpush1.xpose.msra.mxu0 0.0
        %413 = vmatprep.subr.mxu0 0.0
        %414 = vmatpush1.xpose.msra.mxu0 0.0
        %415 = vmatprep.subr.mxu0 0.0
        %416 = vmatpush1.xpose.msra.mxu0 0.0
        %417 = vmatprep.subr.mxu0 0.0
        %418 = vmatpush1.xpose.msra.mxu0 0.0
        %419 = vmatprep.subr.mxu0 0.0
        %420 = vmatpush1.xpose.msra.mxu0 0.0
        %421 = vmatprep.subr.mxu0 0.0
        %422 = vmatpush1.xpose.msra.mxu0 0.0
        %423 = vmatprep.subr.mxu0 0.0
        %424 = vmatpush1.xpose.msra.mxu0 0.0
        %425 = vmatprep.subr.mxu0 0.0
        %426 = vmatpush1.xpose.msra.mxu0 0.0
        %427 = vmatprep.subr.mxu0 0.0
        %428 = vmatpush1.xpose.msra.mxu0 0.0
        %429 = vmatprep.subr.mxu0 0.0
        %430 = vmatpush1.xpose.msra.mxu0 0.0
        %431 = vmatprep.subr.mxu0 0.0
        %432 = vmatpush1.xpose.msra.mxu0 0.0
        %433 = vmatprep.subr.mxu0 0.0
        %434 = vmatpush1.xpose.msra.mxu0 0.0
        %435 = vmatprep.subr.mxu0 0.0
        %436 = vmatpush1.xpose.msra.mxu0 0.0
        %437 = vmatprep.subr.mxu0 0.0
        %438 = vmatpush1.xpose.msra.mxu0 0.0
        %439 = vmatprep.subr.mxu0 0.0
        %440 = vmatpush1.xpose.msra.mxu0 0.0
        %441 = vmatprep.subr.mxu0 0.0
        %442 = vmatpush1.xpose.msra.mxu0 0.0
        %443 = vmatprep.mubr.f32.mxu0 0.0
        %444 = vmatmul.mubr.f32.gmra.mrb[0].mxu0 %v374
        %v445 = vpop.f32.mrb[0].mxu0
        %v446 = vadd.f32 %v336, %v445
        %v447 = vpop.f32.mrb[0].mxu0
        %448 = vdwg.mxu0
        %v449 = vmax.f32 %v446, 0.0
        %vm450 = vcmask 15360
        %v452 = vsel %vm450, %v449, 0
        %v455 = vsel %vm450, %v337, 0
        %v458 = vsel %vm450, %v338, 0
        %v461 = vsel %vm450, %v339, 0
        %v464 = vsel %vm450, %v340, 0
        %466 = vmatprep.subr.mxu0 0.0
        %467 = vmatpush1.xpose.msra.mxu0 %v455
        %468 = vmatprep.subr.mxu0 0.0
        %469 = vmatpush1.xpose.msra.mxu0 %v458
        %470 = vmatprep.subr.mxu0 0.0
        %471 = vmatpush1.xpose.msra.mxu0 %v461
        %472 = vmatprep.subr.mxu0 0.0
        %473 = vmatpush1.xpose.msra.mxu0 %v464
        %474 = vmatprep.subr.mxu0 0.0
        %475 = vmatpush1.xpose.msra.mxu0 0.0
        %476 = vmatprep.subr.mxu0 0.0
        %477 = vmatpush1.xpose.msra.mxu0 0.0
        %478 = vmatprep.subr.mxu0 0.0
        %479 = vmatpush1.xpose.msra.mxu0 0.0
        %480 = vmatprep.subr.mxu0 0.0
        %481 = vmatpush1.xpose.msra.mxu0 0.0
        %482 = vmatprep.subr.mxu0 0.0
        %483 = vmatpush1.xpose.msra.mxu0 0.0
        %484 = vmatprep.subr.mxu0 0.0
        %485 = vmatpush1.xpose.msra.mxu0 0.0
        %486 = vmatprep.subr.mxu0 0.0
        %487 = vmatpush1.xpose.msra.mxu0 0.0
        %488 = vmatprep.subr.mxu0 0.0
        %489 = vmatpush1.xpose.msra.mxu0 0.0
        %490 = vmatprep.subr.mxu0 0.0
        %491 = vmatpush1.xpose.msra.mxu0 0.0
        %492 = vmatprep.subr.mxu0 0.0
        %493 = vmatpush1.xpose.msra.mxu0 0.0
        %494 = vmatprep.subr.mxu0 0.0
        %495 = vmatpush1.xpose.msra.mxu0 0.0
        %496 = vmatprep.subr.mxu0 0.0
        %497 = vmatpush1.xpose.msra.mxu0 0.0
        %498 = vmatprep.subr.mxu0 0.0
        %499 = vmatpush1.xpose.msra.mxu0 0.0
        %500 = vmatprep.subr.mxu0 0.0
        %501 = vmatpush1.xpose.msra.mxu0 0.0
        %502 = vmatprep.subr.mxu0 0.0
        %503 = vmatpush1.xpose.msra.mxu0 0.0
        %504 = vmatprep.subr.mxu0 0.0
        %505 = vmatpush1.xpose.msra.mxu0 0.0
        %506 = vmatprep.subr.mxu0 0.0
        %507 = vmatpush1.xpose.msra.mxu0 0.0
        %508 = vmatprep.subr.mxu0 0.0
        %509 = vmatpush1.xpose.msra.mxu0 0.0
        %510 = vmatprep.subr.mxu0 0.0
        %511 = vmatpush1.xpose.msra.mxu0 0.0
        %512 = vmatprep.subr.mxu0 0.0
        %513 = vmatpush1.xpose.msra.mxu0 0.0
        %514 = vmatprep.subr.mxu0 0.0
        %515 = vmatpush1.xpose.msra.mxu0 0.0
        %516 = vmatprep.subr.mxu0 0.0
        %517 = vmatpush1.xpose.msra.mxu0 0.0
        %518 = vmatprep.subr.mxu0 0.0
        %519 = vmatpush1.xpose.msra.mxu0 0.0
        %520 = vmatprep.subr.mxu0 0.0
        %521 = vmatpush1.xpose.msra.mxu0 0.0
        %522 = vmatprep.subr.mxu0 0.0
        %523 = vmatpush1.xpose.msra.mxu0 0.0
        %524 = vmatprep.subr.mxu0 0.0
        %525 = vmatpush1.xpose.msra.mxu0 0.0
        %526 = vmatprep.subr.mxu0 0.0
        %527 = vmatpush1.xpose.msra.mxu0 0.0
        %528 = vmatprep.subr.mxu0 0.0
        %529 = vmatpush1.xpose.msra.mxu0 0.0
        %530 = vmatprep.mubr.f32.mxu0 0.0
        %531 = vmatmul.mubr.f32.gmra.mrb[0].mxu0 %v452
        %v532 = vpop.f32.mrb[0].mxu0
        %v533 = vadd.f32 %v341, %v532
        %v534 = vpop.f32.mrb[0].mxu0
        %535 = vdwg.mxu0
        %v536 = vxor.u32 %v533, 2147483648
        %v537 = vmul.f32 %v536, 1.442695
        %v538 = vpow.pop %v537
        %v539 = vadd.f32 %v538, 1.0
        %v540 = vrcp.pop %v539
        %v541 = vmul.f32 1.0, %v540
        %v542 = vlaneseq
        %v543 = vshrl.u32 %v542, 7
        %v544 = vsub.s32 0, %v543
        %v545 = vrot.slane %v541, %v544
        %547 = vbcast.lane.b32.xlu0 %v545, 256
        %v548 = vpop.permute.xlu0 %547
        %s550 = sor.u32 256, 8
        %551 = vbcast.lane.b32.xlu0 %v545, %s550
        %v552 = vpop.permute.xlu0 %551
        %s554 = sor.u32 256, 16
        %555 = vbcast.lane.b32.xlu0 %v545, %s554
        %v556 = vpop.permute.xlu0 %555
        %s558 = sor.u32 256, 24
        %559 = vbcast.lane.b32.xlu0 %v545, %s558
        %v560 = vpop.permute.xlu0 %559
        %v561 = vmul.f32 %v243, %v548
        %v562 = vmul.f32 %v244, %v548
        %v563 = vmul.f32 %v245, %v552
        %v564 = vmul.f32 %v246, %v552
        %v565 = vmul.f32 %v247, %v556
        %v566 = vmul.f32 %v248, %v556
        %v567 = vmul.f32 %v249, %v560
        %v568 = vmul.f32 %v250, %v560
        %569 = vst [vmem:[%s242] sm:$0xff] %v561
        %570 = vst [vmem:[%s242 + $0x8] sm:$0xff] %v562
        %571 = vst [vmem:[%s242 + $0x10] sm:$0xff] %v563
        %572 = vst [vmem:[%s242 + $0x18] sm:$0xff] %v564
        %573 = vst [vmem:[%s242 + $0x20] sm:$0xff] %v565
        %574 = vst [vmem:[%s242 + $0x28] sm:$0xff] %v566
        %575 = vst [vmem:[%s242 + $0x30] sm:$0xff] %v567
        %576 = vst [vmem:[%s242 + $0x38] sm:$0xff] %v568
        %s577 = sand.u32 %s140, 1
        %s578 = scalar_lea.sflag [#allocation4], %s577
        %s579 = sand.u32 %s140, 1
        %s580 = smul.addr %s579, 64
        %s581 = scalar_lea.vmem [#allocation5], %s580
        // Predicated region
        $region45: #{tpu_custom_call.1} parent=39 // pred_check
          %p582 = pneg %p150
        $region46: #{tpu_custom_call.1} parent=39 // pred_check_branch
          %584 = sbr.rel (%p582) target = $region48
        $region47: #{tpu_custom_call.1} parent=39 // pred_region
          %s586 = ssub.s32 1024, 1024
          %587 = vsyncadd %s578, %s586
          %s588 = smul.addr %s22, 8
          %s589 = smul.addr %s588, 128
          %s590 = scalar_lea.hbm %s5, %s589
          %s591 = sshll.u32 %s581, 4
          %s592 = int_to_ptr.vmem [resolvable:$true] %s591
          %597 = dma.vmem_to_hbm [thread:$0]  %s592, 1024, %s590, %s578, 256, 256, 16
        $region48: #{tpu_custom_call.1} parent=39 // pred_fallthru
          _
      $region40: #{tpu_custom_call.1} parent=5 // pred_fallthru
        _
      %p598 = scmp.le.s32.totalorder 2, %s17
      // Predicated region
      $region49: #{tpu_custom_call.1} parent=5 // pred_check
        %p599 = pneg %p598
      $region50: #{tpu_custom_call.1} parent=5 // pred_check_branch
        %601 = sbr.rel (%p599) target = $region52
      $region51: #{tpu_custom_call.1} parent=5 // pred_region
        %s602 = ssub.s32 %s17, 2
        // Predicated region
        $region53: #{tpu_custom_call.1} parent=51 // pred_check
          %p603 = pneg %p156
        $region54: #{tpu_custom_call.1} parent=51 // pred_check_branch
          %605 = sbr.rel (%p603) target = $region56
        $region55: #{tpu_custom_call.1} parent=51 // pred_region
          %s606 = sand.u32 %s141, 1
          %s607 = scalar_lea.sflag [#allocation4], %s606
          %s608 = sand.u32 %s141, 1
          %s609 = smul.addr %s608, 64
          %s610 = scalar_lea.vmem [#allocation5], %s609
          %611 = dma.done %s607, 1024
        $region56: #{tpu_custom_call.1} parent=51 // pred_fallthru
          _
      $region52: #{tpu_custom_call.1} parent=5 // pred_fallthru
        _
    $region6: #{tpu_custom_call.1} parent=1 // loop_footer
      %s21 = sadd.s32 1, %s17
    $region7: #{tpu_custom_call.1} parent=1 // loop_footer_branch
      %16 = sbr.rel target = $region3
    $region8: #{tpu_custom_call.1} parent=1 // loop_exit
      _
    %612 = vsyncpa [#allocation3], 1
    %s613 = scalar_lea.sflag [#allocation3], 1
    %614 = vsyncpa %s613, 1
    %615 = vsyncpa [#allocation4], 1
    %s616 = scalar_lea.sflag [#allocation4], 1
    %617 = vsyncpa %s616, 1

</llo_original>
